<compile_context>
chip_gen: v7x
topology: tpu7x:2x2x1
jax: 0.10.0
libtpu: 0.0.40
codegen_flags: <defaults>
</compile_context>

<pallas_src>
import functools

import numpy as np
import jax
import jax.numpy as jnp
from jax.experimental import pallas as pl
from jax.experimental.pallas import tpu as pltpu


# ------------------------------ Pallas kernel --------------------------------
def _splice_dma_kernel(h_ref, v_ref, o_ref, sem, *, phl, v_len, seq):
    """Splice vision tokens into the text sequence with three HBM->HBM DMAs.

    h_ref: [B, S, D] (HBM)   v_ref: [B, V, D] (HBM)   o_ref: [B, S+V, D] (HBM)
    prompt_head_len / shapes are static, so every slice is static and each
    region becomes one strided DMA descriptor.
    """
    copies = []
    if phl > 0:                                    # head: hidden[:, :phl]
        copies.append(pltpu.make_async_copy(
            h_ref.at[:, :phl, :], o_ref.at[:, :phl, :], sem.at[0]))
    copies.append(pltpu.make_async_copy(           # vision block
        v_ref, o_ref.at[:, phl:phl + v_len, :], sem.at[1]))
    if phl < seq:                                  # tail: hidden[:, phl:]
        copies.append(pltpu.make_async_copy(
            h_ref.at[:, phl:, :], o_ref.at[:, phl + v_len:, :], sem.at[2]))

    # Issue every descriptor first so the three DMAs overlap, then wait.
    for c in copies:
        c.start()
    for c in copies:
        c.wait()


def internvl_part_b(hidden_states, vision_embed, prompt_head_len):
    """hidden_states: [B, S, D], vision_embed: [B, V, D] -> [B, S + V, D]."""
    B, S, D = hidden_states.shape
    Bv, V, Dv = vision_embed.shape
    assert B == Bv and D == Dv, (hidden_states.shape, vision_embed.shape)
    # torch.cat errors on dtype mismatch; mirror that instead of silently casting.
    assert hidden_states.dtype == vision_embed.dtype, (
        hidden_states.dtype, vision_embed.dtype)

    phl = int(prompt_head_len)
    assert 0 <= phl <= S
    # TODO(synk): if the export ever makes prompt_head_len a traced value, this
    # needs scalar prefetch (SMEM) + pl.ds-based DMA offsets instead of int().

    itemsize = jnp.dtype(hidden_states.dtype).itemsize
    bytes_accessed = 2 * B * (S + V) * D * itemsize   # read everything + write out

    kernel = functools.partial(_splice_dma_kernel, phl=phl, v_len=V, seq=S)
    return pl.pallas_call(
        kernel,
        out_shape=jax.ShapeDtypeStruct((B, S + V, D), hidden_states.dtype),
        in_specs=[
            pl.BlockSpec(memory_space=pl.ANY),   # hidden_states stays in HBM
            pl.BlockSpec(memory_space=pl.ANY),   # vision_embed stays in HBM
        ],
        out_specs=pl.BlockSpec(memory_space=pl.ANY),
        scratch_shapes=[pltpu.SemaphoreType.DMA((3,))],
        cost_estimate=pl.CostEstimate(
            flops=0, transcendentals=0, bytes_accessed=bytes_accessed),
    )(hidden_states, vision_embed)


# ---------------------------------- main --------------------------------------
if __name__ == "__main__":
    key = jax.random.PRNGKey(0)
    k1, k2 = jax.random.split(key)

    # Small shapes consistent with the module (dynamic seq axis in the export):
    B = 2                  # batch
    SEQ = 32               # text-token sequence length
    VIS = 16               # number of vision tokens spliced in
    DIM = 128              # hidden size (small lane-dense stand-in)
    PROMPT_HEAD_LEN = 8    # tokens before the <img></img> slot

    hidden_states = jax.random.normal(k1, (B, SEQ, DIM), jnp.float32)
    vision_embed = jax.random.normal(k2, (B, VIS, DIM), jnp.float32)

    out = internvl_part_b(hidden_states, vision_embed, PROMPT_HEAD_LEN)
    out = jax.block_until_ready(out)

    # pure-JAX reference (mirrors torch.cat along dim=1)
    ref = jnp.concatenate(
        [hidden_states[:, :PROMPT_HEAD_LEN],
         vision_embed,
         hidden_states[:, PROMPT_HEAD_LEN:]], axis=1)
    ref = jax.block_until_ready(ref)

    assert out.shape == (B, SEQ + VIS, DIM), out.shape
    assert np.array_equal(np.asarray(out), np.asarray(ref)), "mismatch vs reference"

    print("KERNEL_OK")
</pallas_src>

<mosaic_0001>
module attributes {stable_mosaic.version = 11 : i64} {
  func.func @_splice_dma_kernel(%arg0: memref<2x32x128xf32, #tpu.memory_space<any>>, %arg1: memref<2x16x128xf32, #tpu.memory_space<any>>, %arg2: memref<2x48x128xf32, #tpu.memory_space<any>>, %arg3: memref<3x!tpu.dma_semaphore, #tpu.memory_space<semaphore_mem>>) attributes {dimension_semantics = [], scalar_prefetch = 0 : i64, scratch_operands = 1 : i64, tpu.core_type = #tpu.core_type<tc>} {
    %c0_i32 = arith.constant 0 : i32
    %c0_i32_0 = arith.constant 0 : i32
    %c0_i32_1 = arith.constant 0 : i32
    %c0_i32_2 = arith.constant 0 : i32
    %0 = tpu.memref_slice %arg0[%c0_i32_0, %c0_i32_1, %c0_i32_2] : memref<2x32x128xf32, #tpu.memory_space<any>> -> memref<2x8x128xf32, #tpu.memory_space<any>>
    %c0_i32_3 = arith.constant 0 : i32
    %c0_i32_4 = arith.constant 0 : i32
    %c0_i32_5 = arith.constant 0 : i32
    %1 = tpu.memref_slice %arg2[%c0_i32_3, %c0_i32_4, %c0_i32_5] : memref<2x48x128xf32, #tpu.memory_space<any>> -> memref<2x8x128xf32, #tpu.memory_space<any>>
    %2 = tpu.memref_slice %arg3[%c0_i32] : memref<3x!tpu.dma_semaphore, #tpu.memory_space<semaphore_mem>> -> memref<1x!tpu.dma_semaphore, #tpu.memory_space<semaphore_mem>>
    %3 = tpu.memref_squeeze %2 : memref<1x!tpu.dma_semaphore, #tpu.memory_space<semaphore_mem>> -> memref<!tpu.dma_semaphore, #tpu.memory_space<semaphore_mem>>
    tpu.enqueue_dma source(%0 : memref<2x8x128xf32, #tpu.memory_space<any>>) target(%1 : memref<2x8x128xf32, #tpu.memory_space<any>>) target_semaphore(%3 : memref<!tpu.dma_semaphore, #tpu.memory_space<semaphore_mem>>)
    %c1_i32 = arith.constant 1 : i32
    %c0_i32_6 = arith.constant 0 : i32
    %c8_i32 = arith.constant 8 : i32
    %c0_i32_7 = arith.constant 0 : i32
    %4 = tpu.memref_slice %arg2[%c0_i32_6, %c8_i32, %c0_i32_7] : memref<2x48x128xf32, #tpu.memory_space<any>> -> memref<2x16x128xf32, #tpu.memory_space<any>>
    %5 = tpu.memref_slice %arg3[%c1_i32] : memref<3x!tpu.dma_semaphore, #tpu.memory_space<semaphore_mem>> -> memref<1x!tpu.dma_semaphore, #tpu.memory_space<semaphore_mem>>
    %6 = tpu.memref_squeeze %5 : memref<1x!tpu.dma_semaphore, #tpu.memory_space<semaphore_mem>> -> memref<!tpu.dma_semaphore, #tpu.memory_space<semaphore_mem>>
    tpu.enqueue_dma source(%arg1 : memref<2x16x128xf32, #tpu.memory_space<any>>) target(%4 : memref<2x16x128xf32, #tpu.memory_space<any>>) target_semaphore(%6 : memref<!tpu.dma_semaphore, #tpu.memory_space<semaphore_mem>>)
    %c2_i32 = arith.constant 2 : i32
    %c0_i32_8 = arith.constant 0 : i32
    %c8_i32_9 = arith.constant 8 : i32
    %c0_i32_10 = arith.constant 0 : i32
    %7 = tpu.memref_slice %arg0[%c0_i32_8, %c8_i32_9, %c0_i32_10] : memref<2x32x128xf32, #tpu.memory_space<any>> -> memref<2x24x128xf32, #tpu.memory_space<any>>
    %c0_i32_11 = arith.constant 0 : i32
    %c24_i32 = arith.constant 24 : i32
    %c0_i32_12 = arith.constant 0 : i32
    %8 = tpu.memref_slice %arg2[%c0_i32_11, %c24_i32, %c0_i32_12] : memref<2x48x128xf32, #tpu.memory_space<any>> -> memref<2x24x128xf32, #tpu.memory_space<any>>
    %9 = tpu.memref_slice %arg3[%c2_i32] : memref<3x!tpu.dma_semaphore, #tpu.memory_space<semaphore_mem>> -> memref<1x!tpu.dma_semaphore, #tpu.memory_space<semaphore_mem>>
    %10 = tpu.memref_squeeze %9 : memref<1x!tpu.dma_semaphore, #tpu.memory_space<semaphore_mem>> -> memref<!tpu.dma_semaphore, #tpu.memory_space<semaphore_mem>>
    tpu.enqueue_dma source(%7 : memref<2x24x128xf32, #tpu.memory_space<any>>) target(%8 : memref<2x24x128xf32, #tpu.memory_space<any>>) target_semaphore(%10 : memref<!tpu.dma_semaphore, #tpu.memory_space<semaphore_mem>>)
    %c0_i32_13 = arith.constant 0 : i32
    %c0_i32_14 = arith.constant 0 : i32
    %c0_i32_15 = arith.constant 0 : i32
    %c0_i32_16 = arith.constant 0 : i32
    %11 = tpu.memref_slice %arg0[%c0_i32_14, %c0_i32_15, %c0_i32_16] : memref<2x32x128xf32, #tpu.memory_space<any>> -> memref<2x8x128xf32, #tpu.memory_space<any>>
    %c0_i32_17 = arith.constant 0 : i32
    %c0_i32_18 = arith.constant 0 : i32
    %c0_i32_19 = arith.constant 0 : i32
    %12 = tpu.memref_slice %arg2[%c0_i32_17, %c0_i32_18, %c0_i32_19] : memref<2x48x128xf32, #tpu.memory_space<any>> -> memref<2x8x128xf32, #tpu.memory_space<any>>
    %13 = tpu.memref_slice %arg3[%c0_i32_13] : memref<3x!tpu.dma_semaphore, #tpu.memory_space<semaphore_mem>> -> memref<1x!tpu.dma_semaphore, #tpu.memory_space<semaphore_mem>>
    %14 = tpu.memref_squeeze %13 : memref<1x!tpu.dma_semaphore, #tpu.memory_space<semaphore_mem>> -> memref<!tpu.dma_semaphore, #tpu.memory_space<semaphore_mem>>
    tpu.wait_dma2 semaphore(%14 : memref<!tpu.dma_semaphore, #tpu.memory_space<semaphore_mem>>) src(%11 : memref<2x8x128xf32, #tpu.memory_space<any>>) dst(%12 : memref<2x8x128xf32, #tpu.memory_space<any>>)
    %c1_i32_20 = arith.constant 1 : i32
    %c0_i32_21 = arith.constant 0 : i32
    %c8_i32_22 = arith.constant 8 : i32
    %c0_i32_23 = arith.constant 0 : i32
    %15 = tpu.memref_slice %arg2[%c0_i32_21, %c8_i32_22, %c0_i32_23] : memref<2x48x128xf32, #tpu.memory_space<any>> -> memref<2x16x128xf32, #tpu.memory_space<any>>
    %16 = tpu.memref_slice %arg3[%c1_i32_20] : memref<3x!tpu.dma_semaphore, #tpu.memory_space<semaphore_mem>> -> memref<1x!tpu.dma_semaphore, #tpu.memory_space<semaphore_mem>>
    %17 = tpu.memref_squeeze %16 : memref<1x!tpu.dma_semaphore, #tpu.memory_space<semaphore_mem>> -> memref<!tpu.dma_semaphore, #tpu.memory_space<semaphore_mem>>
    tpu.wait_dma2 semaphore(%17 : memref<!tpu.dma_semaphore, #tpu.memory_space<semaphore_mem>>) src(%arg1 : memref<2x16x128xf32, #tpu.memory_space<any>>) dst(%15 : memref<2x16x128xf32, #tpu.memory_space<any>>)
    %c2_i32_24 = arith.constant 2 : i32
    %c0_i32_25 = arith.constant 0 : i32
    %c8_i32_26 = arith.constant 8 : i32
    %c0_i32_27 = arith.constant 0 : i32
    %18 = tpu.memref_slice %arg0[%c0_i32_25, %c8_i32_26, %c0_i32_27] : memref<2x32x128xf32, #tpu.memory_space<any>> -> memref<2x24x128xf32, #tpu.memory_space<any>>
    %c0_i32_28 = arith.constant 0 : i32
    %c24_i32_29 = arith.constant 24 : i32
    %c0_i32_30 = arith.constant 0 : i32
    %19 = tpu.memref_slice %arg2[%c0_i32_28, %c24_i32_29, %c0_i32_30] : memref<2x48x128xf32, #tpu.memory_space<any>> -> memref<2x24x128xf32, #tpu.memory_space<any>>
    %20 = tpu.memref_slice %arg3[%c2_i32_24] : memref<3x!tpu.dma_semaphore, #tpu.memory_space<semaphore_mem>> -> memref<1x!tpu.dma_semaphore, #tpu.memory_space<semaphore_mem>>
    %21 = tpu.memref_squeeze %20 : memref<1x!tpu.dma_semaphore, #tpu.memory_space<semaphore_mem>> -> memref<!tpu.dma_semaphore, #tpu.memory_space<semaphore_mem>>
    tpu.wait_dma2 semaphore(%21 : memref<!tpu.dma_semaphore, #tpu.memory_space<semaphore_mem>>) src(%18 : memref<2x24x128xf32, #tpu.memory_space<any>>) dst(%19 : memref<2x24x128xf32, #tpu.memory_space<any>>)
    return
  }
}

</mosaic_0001>

<llo_original>
// kernel: tpu_custom_call.1
$region0: #{tpu_custom_call.1}
  #allocation0 [shape = 'u32[]', space=smem, size = 0x4, offset = 0x4, fixed_abs, tag = 'smem constant byte address 0x4 - core index']
  #allocation1 [shape = 'u32[144,128]{1,0:T(1,128)}', space=vmem, size = 0x12000, scoped, tag = 'internal scratch']
  #allocation2 [shape = 's32[3]{0}', space=sflag, size = 0xc, scoped, tag = 'scratch operand']
  #allocation3 [shape = 's32[]', space=sflag, size = 0x4, offset = 0, fixed_abs, tag = 'sflag constant byte address 0x0 - dummy sync flag']
  #allocation5 [shape = 's32[]', space=sflag, size = 0x4, offset = 0, fixed_abs, tag = 'sflag constant byte address 0x0 - dummy sync flag']
  #allocation7 [shape = 's32[]', space=sflag, size = 0x4, offset = 0, fixed_abs, tag = 'sflag constant byte address 0x0 - dummy sync flag']
  %s0 = inlined_call_operand.hbm [shape: f32[2,32,128], index: 0, kind: input, shape index: {}]
  %s1 = inlined_call_operand.hbm [shape: f32[2,16,128], index: 1, kind: input, shape index: {}]
  %s2 = inlined_call_operand.hbm [shape: f32[2,48,128], index: 2, kind: output, shape index: {}]
  %s3 = sld [smem:[#allocation0]]
  $region2: #{tpu_custom_call.1} parent=0
    _
  %s5 = ssub.s32 1, %s3
  %s6 = scalar_select 0, %s5, %s3
  $region1: #{tpu_custom_call.1} parent=0
    #allocation4 [shape = 'u32[3]{0}', space=smem, size = 0xc, scoped, tag = 'DMA stride descriptor']
    #allocation6 [shape = 'u32[3]{0}', space=smem, size = 0xc, scoped, tag = 'DMA stride descriptor']
    #allocation8 [shape = 'u32[3]{0}', space=smem, size = 0xc, scoped, tag = 'DMA stride descriptor']
    %s8 = sshll.u32 1, 14
    %s9 = sxor.u32 4294967295, %s8
    %s12 = sshll.u32 3, 24
    %s13 = sxor.u32 4294967295, %s12
    %s14 = sand.u32 0, %s13
    %s16 = sor.u32 %s14, 0
    %19 = sst [smem:[#allocation4]] 512
    %s20 = scalar_lea.smem [#allocation4], 1
    %21 = sst [smem:[%s20]] 768
    %s22 = scalar_lea.smem [#allocation4], 2
    %23 = sst [smem:[%s22]] 8
    %25 = dma.general %s0, 256, %s2, [#allocation2], [#allocation3], [#allocation4], %s16, 0
    %s26 = scalar_lea.hbm %s2, 128
    %s27 = scalar_lea.sflag [#allocation2], 1
    %s29 = sshll.u32 1, 14
    %s30 = sxor.u32 4294967295, %s29
    %s33 = sshll.u32 3, 24
    %s34 = sxor.u32 4294967295, %s33
    %s35 = sand.u32 0, %s34
    %s37 = sor.u32 %s35, 0
    %40 = sst [smem:[#allocation6]] 256
    %s41 = scalar_lea.smem [#allocation6], 1
    %42 = sst [smem:[%s41]] 768
    %s43 = scalar_lea.smem [#allocation6], 2
    %44 = sst [smem:[%s43]] 16
    %46 = dma.general %s1, 512, %s26, %s27, [#allocation5], [#allocation6], %s37, 0
    %s47 = scalar_lea.hbm %s0, 128
    %s48 = scalar_lea.hbm %s2, 384
    %s49 = scalar_lea.sflag [#allocation2], 2
    %s51 = sshll.u32 1, 14
    %s52 = sxor.u32 4294967295, %s51
    %s55 = sshll.u32 3, 24
    %s56 = sxor.u32 4294967295, %s55
    %s57 = sand.u32 0, %s56
    %s59 = sor.u32 %s57, 0
    %62 = sst [smem:[#allocation8]] 512
    %s63 = scalar_lea.smem [#allocation8], 1
    %64 = sst [smem:[%s63]] 768
    %s65 = scalar_lea.smem [#allocation8], 2
    %66 = sst [smem:[%s65]] 24
    %68 = dma.general %s47, 768, %s48, %s49, [#allocation7], [#allocation8], %s59, 0
    %s69 = smul.u32 2, 8
    %s70 = smul.u32 %s69, 1
    %s71 = sshll.u32 %s70, 4
    %72 = dma.done [#allocation2], %s71
    %s73 = smul.u32 2, 16
    %s74 = smul.u32 %s73, 1
    %s75 = sshll.u32 %s74, 4
    %76 = dma.done %s27, %s75
    %s77 = smul.u32 2, 24
    %s78 = smul.u32 %s77, 1
    %s79 = sshll.u32 %s78, 4
    %80 = dma.done %s49, %s79
  %81 = vsyncmov [#allocation2]
  %s82 = vpop.sfrf %81
  %p83 = scmp.eq.s32.totalorder %s82, 0
  %p84 = pneg %p83
  %86 = shalt.err (%p84)
  %s87 = scalar_lea.sflag [#allocation2], 1
  %88 = vsyncmov %s87
  %s89 = vpop.sfrf %88
  %p90 = scmp.eq.s32.totalorder %s89, 0
  %p91 = pneg %p90
  %93 = shalt.err (%p91)
  %s94 = scalar_lea.sflag [#allocation2], 2
  %95 = vsyncmov %s94
  %s96 = vpop.sfrf %95
  %p97 = scmp.eq.s32.totalorder %s96, 0
  %p98 = pneg %p97
  %100 = shalt.err (%p98)

</llo_original>
